<compile_context>
chip_gen: v7x
topology: tpu7x:2x2x1
jax: 0.10.0
libtpu: 0.0.40
codegen_flags: <defaults>
</compile_context>

<pallas_src>
import jax
import jax.numpy as jnp
from jax.experimental import pallas as pl
from jax.experimental.pallas import tpu as pltpu

LANES = 1024          # lane-dense slab width (multiple of 128)
MAX_TILE_ROWS = 256   # 256 x 1024 f32 = 1 MiB per buffer


def _add_gaussian_noise_kernel(params_ref, x_ref, z_ref, o_ref):
    """params_ref: SMEM f32[2] = [mean/128, std/128]; z_ref: standard-normal draws.

    out = x + (mean + std * z) / 128, with the 1/128 scale pre-folded into the
    SMEM scalars so the per-element vector work is a single FMA + add.
    """
    mean_s = params_ref[0]
    std_s = params_ref[1]
    x = x_ref[...].astype(jnp.float32)
    z = z_ref[...].astype(jnp.float32)
    o_ref[...] = (x + (mean_s + std_s * z)).astype(o_ref.dtype)


def gaussian_noise_pallas(x, mean, std, key):
    """Elementwise x + N(mean, std)/128 with the affine+add fused in a Pallas kernel."""
    orig_shape = x.shape
    orig_dtype = x.dtype

    # Keep kernel I/O in the native floating dtype (halves HBM traffic for bf16).
    io_dtype = orig_dtype if jnp.issubdtype(orig_dtype, jnp.floating) else jnp.float32

    flat = x.reshape(-1)
    if flat.dtype != io_dtype:
        flat = flat.astype(io_dtype)
    n = flat.shape[0]

    # Pad only when the flat size is not already lane-aligned (no-op for typical images).
    pad = (-n) % LANES
    if pad:
        flat = jnp.pad(flat, (0, pad))
    rows = flat.shape[0] // LANES
    x2d = flat.reshape(rows, LANES)

    # Standard-normal draws generated directly in the kernel's lane-dense layout/dtype.
    z2d = jax.random.normal(key, (rows, LANES), dtype=io_dtype)

    # Fold the 1/128 scale into the SMEM scalars (saves a per-element multiply).
    params = (jnp.stack([jnp.asarray(mean, jnp.float32),
                         jnp.asarray(std, jnp.float32)])
              * jnp.float32(1.0 / 128.0))

    # Large blocks; block rows either divide by 8 (MAX_TILE_ROWS) or equal the full dim.
    tile_rows = rows if rows <= MAX_TILE_ROWS else MAX_TILE_ROWS
    grid = (pl.cdiv(rows, tile_rows),)

    itemsize = jnp.dtype(io_dtype).itemsize
    cost = pl.CostEstimate(
        flops=2 * rows * LANES,                      # FMA + add per element
        transcendentals=0,
        bytes_accessed=3 * rows * LANES * itemsize,  # x read, z read, out write
    )

    out2d = pl.pallas_call(
        _add_gaussian_noise_kernel,
        out_shape=jax.ShapeDtypeStruct((rows, LANES), io_dtype),
        grid=grid,
        in_specs=[
            pl.BlockSpec(memory_space=pltpu.MemorySpace.SMEM),   # [mean/128, std/128]
            pl.BlockSpec((tile_rows, LANES), lambda i: (i, 0)),  # x tile
            pl.BlockSpec((tile_rows, LANES), lambda i: (i, 0)),  # z tile
        ],
        out_specs=pl.BlockSpec((tile_rows, LANES), lambda i: (i, 0)),
        compiler_params=pltpu.CompilerParams(
            # Independent tiles -> shard grid across the 2 TensorCores on v7x.
            dimension_semantics=("parallel",),
        ),
        cost_estimate=cost,
    )(params, x2d, z2d)

    out = out2d.reshape(-1)
    if pad:
        out = out[:n]
    out = out.reshape(orig_shape)
    if jnp.issubdtype(orig_dtype, jnp.floating):
        out = out.astype(orig_dtype)
    return out


class GaussianNoise:
    """JAX/Pallas port of the PyTorch GaussianNoise module."""

    def __init__(self, opt):
        cfg = opt['noise']['GaussianNoise']
        self.mean = float(cfg['mean'])
        self.min_val = float(cfg['min_variance'])
        self.max_val = float(cfg['max_variance'])

    def __call__(self, encoded, key, cover_img=None):
        # var ~ U[min_val, max_val]; used directly as the std of the normal,
        # matching np.random.normal(mean, var, ...) in the reference (not sqrt(var)).
        k_var, k_noise = jax.random.split(key)
        var = self.min_val + jax.random.uniform(
            k_var, (), dtype=jnp.float32) * (self.max_val - self.min_val)
        return gaussian_noise_pallas(encoded, self.mean, var, k_noise)


if __name__ == "__main__":
    key = jax.random.PRNGKey(0)
    k_x, k_noise = jax.random.split(key)

    # Small NCHW input consistent with an image watermarking pipeline.
    x = jax.random.normal(k_x, (2, 4, 16, 16), dtype=jnp.float32)

    opt = {'noise': {'GaussianNoise': {'mean': 0.0,
                                       'min_variance': 0.0,
                                       'max_variance': 10.0}}}
    layer = GaussianNoise(opt)

    out = layer(x, k_noise)
    out = jax.block_until_ready(out)

    assert out.shape == x.shape and out.dtype == x.dtype
    assert bool(jnp.all(jnp.isfinite(out)))
    # Noise magnitude sanity check: |out - x| bounded by ~ (mean + 6*max_std)/128.
    assert float(jnp.max(jnp.abs(out - x))) < 1.0

    print("KERNEL_OK")
</pallas_src>

<mosaic_0001>
module attributes {stable_mosaic.version = 11 : i64} {
  func.func @_add_gaussian_noise_kernel(%arg0: i32, %arg1: memref<2xf32, #tpu.memory_space<smem>>, %arg2: memref<2x1024xf32, #tpu.memory_space<vmem>>, %arg3: memref<2x1024xf32, #tpu.memory_space<vmem>>, %arg4: memref<2x1024xf32, #tpu.memory_space<vmem>>) attributes {dimension_semantics = [#tpu.dimension_semantics<parallel>], iteration_bounds = array<i64: 1>, scalar_prefetch = 0 : i64, scratch_operands = 0 : i64, tpu.core_type = #tpu.core_type<tc>, window_params = [{transform_indices = @transform_0, window_bounds = array<i64: 2>}, {transform_indices = @transform_1, window_bounds = array<i64: 2, 1024>}, {transform_indices = @transform_2, window_bounds = array<i64: 2, 1024>}, {transform_indices = @transform_3, window_bounds = array<i64: 2, 1024>}]} {
    %c0 = arith.constant 0 : index
    %0 = memref.load %arg1[%c0] : memref<2xf32, #tpu.memory_space<smem>>
    %c1 = arith.constant 1 : index
    %1 = memref.load %arg1[%c1] : memref<2xf32, #tpu.memory_space<smem>>
    %c0_0 = arith.constant 0 : index
    %c0_1 = arith.constant 0 : index
    %2 = vector.load %arg2[%c0_0, %c0_1] : memref<2x1024xf32, #tpu.memory_space<vmem>>, vector<2x1024xf32>
    %c0_2 = arith.constant 0 : index
    %c0_3 = arith.constant 0 : index
    %3 = vector.load %arg3[%c0_2, %c0_3] : memref<2x1024xf32, #tpu.memory_space<vmem>>, vector<2x1024xf32>
    %4 = vector.broadcast %1 : f32 to vector<2x1024xf32>
    %5 = arith.mulf %4, %3 : vector<2x1024xf32>
    %6 = vector.broadcast %0 : f32 to vector<2x1024xf32>
    %7 = arith.addf %6, %5 : vector<2x1024xf32>
    %8 = arith.addf %2, %7 : vector<2x1024xf32>
    %c0_4 = arith.constant 0 : index
    %c0_5 = arith.constant 0 : index
    %9 = vector.load %arg4[%c0_4, %c0_5] : memref<2x1024xf32, #tpu.memory_space<vmem>>, vector<2x1024xf32>
    tpu.vector_store %arg4[%c0_4, %c0_5], %8 {strides = array<i32>} : memref<2x1024xf32, #tpu.memory_space<vmem>>, vector<2x1024xf32>,
    return
  }
  func.func @transform_0(%arg0: i32) -> i32 {
    %c0_i32 = arith.constant 0 : i32
    %c0_i32_0 = arith.constant 0 : i32
    return %c0_i32 : i32
  }
  func.func @transform_1(%arg0: i32) -> (i32, i32) {
    %c0_i32 = arith.constant 0 : i32
    %c0_i32_0 = arith.constant 0 : i32
    return %arg0, %c0_i32 : i32, i32
  }
  func.func @transform_2(%arg0: i32) -> (i32, i32) {
    %c0_i32 = arith.constant 0 : i32
    %c0_i32_0 = arith.constant 0 : i32
    return %arg0, %c0_i32 : i32, i32
  }
  func.func @transform_3(%arg0: i32) -> (i32, i32) {
    %c0_i32 = arith.constant 0 : i32
    %c0_i32_0 = arith.constant 0 : i32
    return %arg0, %c0_i32 : i32, i32
  }
}

</mosaic_0001>

<llo_original>
// kernel: tpu_custom_call.1
$region0: #{tpu_custom_call.1}
  #allocation0 [shape = 'u32[]', space=smem, size = 0x4, offset = 0x4, fixed_abs, tag = 'smem constant byte address 0x4 - core index']
  #allocation1 [shape = 'u32[144,128]{1,0:T(1,128)}', space=vmem, size = 0x12000, scoped, tag = 'internal scratch']
  %s0 = inlined_call_operand.hbm [shape: f32[2], index: 0, kind: input, shape index: {}]
  %s1 = inlined_call_operand.hbm [shape: f32[2,1024], index: 1, kind: input, shape index: {}]
  %s2 = inlined_call_operand.hbm [shape: f32[2,1024], index: 2, kind: input, shape index: {}]
  %s3 = inlined_call_operand.hbm [shape: f32[2,1024], index: 3, kind: output, shape index: {}]
  %s4 = sld [smem:[#allocation0]]
  $region34: #{tpu_custom_call.1} parent=0
    _
  %s6 = ssub.s32 1, %s4
  %s7 = scalar_select 0, %s6, %s4
  $region1: #{tpu_custom_call.1} parent=0
    #allocation2 [shape = 'u8[512]{0}', space=smem, size = 0x200, scoped, tag = 'input window, operand 0, single buffered']
    #allocation3 [shape = 's32[1]{0}', space=sflag, size = 0x4, scoped, tag = 'scoped memory for tpu_custom_call.1']
    #allocation4 [shape = 's32[1]{0}', space=sflag, size = 0x4, scoped, tag = 'scoped memory for tpu_custom_call.1']
    #allocation5 [shape = 's32[1]{0}', space=sflag, size = 0x4, scoped, tag = 'scoped memory for tpu_custom_call.1']
    #allocation6 [shape = 'u8[8192]{0}', space=vmem, size = 0x2000, scoped, tag = 'input window, operand 1, single buffered']
    #allocation7 [shape = 'u8[8192]{0}', space=vmem, size = 0x2000, scoped, tag = 'input window, operand 2, single buffered']
    #allocation8 [shape = 's32[1]{0}', space=sflag, size = 0x4, scoped, tag = 'scoped memory for tpu_custom_call.1']
    #allocation9 [shape = 'u8[8192]{0}', space=vmem, size = 0x2000, scoped, tag = 'output window, operand 0, single buffered']
    %8 = vsyncpa [#allocation5], 0
    %9 = vsyncpa [#allocation3], 0
    %10 = vsyncpa [#allocation8], 0
    %11 = vsyncpa [#allocation4], 0
    // Predicated region
    $region2: #{tpu_custom_call.1} parent=1 // pred_check
      _
    $region3: #{tpu_custom_call.1} parent=1 // pred_check_branch
      %13 = sbr.rel (0) target = $region5
    $region4: #{tpu_custom_call.1} parent=1 // pred_region
      %s15 = ssub.s32 16, 16
      %16 = vsyncadd [#allocation5], %s15
      %19 = dma.hbm_to_smem %s0, 16, [#allocation2], [#allocation5]
    $region5: #{tpu_custom_call.1} parent=1 // pred_fallthru
      _
    // Predicated region
    $region6: #{tpu_custom_call.1} parent=1 // pred_check
      _
    $region7: #{tpu_custom_call.1} parent=1 // pred_check_branch
      %21 = sbr.rel (0) target = $region9
    $region8: #{tpu_custom_call.1} parent=1 // pred_region
      %s23 = ssub.s32 256, 256
      %24 = vsyncadd [#allocation3], %s23
      %s26 = sshll.u32 [#allocation6], 4
      %s27 = int_to_ptr.vmem [resolvable:$true] %s26
      %29 = dma.hbm_to_vmem [thread:$0]  %s1, 256, %s27, [#allocation3]
    $region9: #{tpu_custom_call.1} parent=1 // pred_fallthru
      _
    // Predicated region
    $region10: #{tpu_custom_call.1} parent=1 // pred_check
      _
    $region11: #{tpu_custom_call.1} parent=1 // pred_check_branch
      %31 = sbr.rel (0) target = $region13
    $region12: #{tpu_custom_call.1} parent=1 // pred_region
      %s33 = ssub.s32 256, 256
      %34 = vsyncadd [#allocation8], %s33
      %s36 = sshll.u32 [#allocation7], 4
      %s37 = int_to_ptr.vmem [resolvable:$true] %s36
      %39 = dma.hbm_to_vmem [thread:$0]  %s2, 256, %s37, [#allocation8]
    $region13: #{tpu_custom_call.1} parent=1 // pred_fallthru
      _
    // Predicated region
    $region14: #{tpu_custom_call.1} parent=1 // pred_check
      _
    $region15: #{tpu_custom_call.1} parent=1 // pred_check_branch
      %41 = sbr.rel (0) target = $region17
    $region16: #{tpu_custom_call.1} parent=1 // pred_region
      %42 = dma.done [#allocation5], 16
    $region17: #{tpu_custom_call.1} parent=1 // pred_fallthru
      _
    // Predicated region
    $region18: #{tpu_custom_call.1} parent=1 // pred_check
      _
    $region19: #{tpu_custom_call.1} parent=1 // pred_check_branch
      %44 = sbr.rel (0) target = $region21
    $region20: #{tpu_custom_call.1} parent=1 // pred_region
      %45 = dma.done [#allocation3], 256
    $region21: #{tpu_custom_call.1} parent=1 // pred_fallthru
      _
    // Predicated region
    $region22: #{tpu_custom_call.1} parent=1 // pred_check
      _
    $region23: #{tpu_custom_call.1} parent=1 // pred_check_branch
      %47 = sbr.rel (0) target = $region25
    $region24: #{tpu_custom_call.1} parent=1 // pred_region
      %48 = dma.done [#allocation8], 256
    $region25: #{tpu_custom_call.1} parent=1 // pred_fallthru
      _
    %49 = sfence
    %s50 = sld [smem:[#allocation2]]
    %s51 = sld [smem:[#allocation2 + $0x1]]
    %v52 = vld [vmem:[#allocation6] sm:$0xff]
    %v53 = vld [vmem:[#allocation6 + $0x8] sm:$0xff]
    %v54 = vld [vmem:[#allocation7] sm:$0xff]
    %v55 = vld [vmem:[#allocation7 + $0x8] sm:$0xff]
    %v56 = vstv %s51
    %v57 = vmul.f32 %v56, %v54
    %v58 = vmul.f32 %v56, %v55
    %v59 = vstv %s50
    %v60 = vadd.f32 %v59, %v57
    %v61 = vadd.f32 %v59, %v58
    %v62 = vadd.f32 %v52, %v60
    %v63 = vadd.f32 %v53, %v61
    %64 = vst [vmem:[#allocation9] sm:$0xff] %v62
    %65 = vst [vmem:[#allocation9 + $0x8] sm:$0xff] %v63
    // Predicated region
    $region26: #{tpu_custom_call.1} parent=1 // pred_check
      _
    $region27: #{tpu_custom_call.1} parent=1 // pred_check_branch
      %67 = sbr.rel (0) target = $region29
    $region28: #{tpu_custom_call.1} parent=1 // pred_region
      %s69 = ssub.s32 256, 256
      %70 = vsyncadd [#allocation4], %s69
      %s72 = sshll.u32 [#allocation9], 4
      %s73 = int_to_ptr.vmem [resolvable:$true] %s72
      %75 = dma.vmem_to_hbm [thread:$0]  %s73, 256, %s3, [#allocation4]
    $region29: #{tpu_custom_call.1} parent=1 // pred_fallthru
      _
    // Predicated region
    $region30: #{tpu_custom_call.1} parent=1 // pred_check
      _
    $region31: #{tpu_custom_call.1} parent=1 // pred_check_branch
      %77 = sbr.rel (0) target = $region33
    $region32: #{tpu_custom_call.1} parent=1 // pred_region
      %78 = dma.done [#allocation4], 256
    $region33: #{tpu_custom_call.1} parent=1 // pred_fallthru
      _
    %79 = vsyncpa [#allocation3], 1
    %80 = vsyncpa [#allocation8], 1
    %81 = vsyncpa [#allocation4], 1
    %82 = vsyncpa [#allocation5], 1

</llo_original>
